<compile_context>
chip_gen: v7x
topology: tpu7x:2x2x1
jax: 0.10.0
libtpu: 0.0.40
codegen_flags: <defaults>
</compile_context>

<pallas_src>
import jax
import jax.numpy as jnp
from jax import lax
from jax.experimental import pallas as pl
from jax.experimental.pallas import tpu as pltpu


def _make_kernel(fuse_kh):
    """Build the kernel body; `fuse_kh` statically selects K=9*C2 vs 3x K=3*C2."""

    def kernel(xc_ref, xt_ref, xb_ref, w1_ref, b1_ref, w2_ref, b2_ref, o_ref):
        TH, W, C = xc_ref.shape
        C2 = w1_ref.shape[1]
        rows_e = TH + 2                 # row tile + 1 halo row above and below
        m_e = rows_e * W                # flattened pixels incl. halo rows
        m = TH * W                      # flattened output pixels
        f32 = jnp.float32
        cdt = w1_ref.dtype              # MXU compute dtype (bf16)

        r = pl.program_id(1)
        nr = pl.num_programs(1)

        w1 = w1_ref[...]
        b1 = b1_ref[...]

        def conv1(x2d):                 # (p, C) -> (p, C2): 1x1 conv + bias + LeakyReLU
            h = jnp.dot(x2d.astype(cdt), w1, preferred_element_type=f32) + b1
            return jnp.maximum(h, 0.1 * h)

        # --- conv1x1 on the three slabs separately (no C-wide x concat) -------
        # Out-of-image halo rows must be exactly zero for conv2's H padding,
        # so the tiny 1-row halo slabs get a scalar keep-factor (interior
        # tiles pay nothing).
        h1c = conv1(xc_ref[...].reshape(m, C))                          # (m, C2)
        h1t = conv1(xt_ref[...].reshape(W, C)) * jnp.where(r == 0, 0.0, 1.0)
        h1b = conv1(xb_ref[...].reshape(W, C)) * jnp.where(r == nr - 1, 0.0, 1.0)
        h1 = jnp.concatenate([h1t, h1c, h1b], axis=0)                   # (m_e, C2) f32

        # --- dx taps: XLU rolls on the flat layout + W-edge masks (no mod) ----
        col = lax.broadcasted_iota(jnp.int32, (rows_e, W, 1), 1).reshape(m_e, 1)
        left = jnp.where(col == 0, 0.0, pltpu.roll(h1, shift=1, axis=0))          # h1[., w-1]
        right = jnp.where(col == W - 1, 0.0, pltpu.roll(h1, shift=m_e - 1, axis=0))  # h1[., w+1]
        taps3 = jnp.concatenate([left, h1, right], axis=-1)             # (m_e, 3*C2) f32

        # --- conv3x3: dy shifts via aligned rolls; accumulate as one value ----
        if fuse_kh:
            # Single dot with K = 9*C2 (shallow stages on the 256-deep MXU).
            lhs = jnp.concatenate(
                [taps3,
                 pltpu.roll(taps3, shift=m_e - W, axis=0),       # taps3[i + W]
                 pltpu.roll(taps3, shift=m_e - 2 * W, axis=0)],  # taps3[i + 2W]
                axis=-1)[:m]
            y2 = jnp.dot(lhs.astype(cdt), w2_ref[...], preferred_element_type=f32)
        else:
            # Three dots with K = 3*C2; no VMEM accumulator round trips.
            y2 = jnp.dot(taps3[:m].astype(cdt), w2_ref[0],
                         preferred_element_type=f32)
            y2 = y2 + jnp.dot(
                pltpu.roll(taps3, shift=m_e - W, axis=0)[:m].astype(cdt),
                w2_ref[1], preferred_element_type=f32)
            y2 = y2 + jnp.dot(
                pltpu.roll(taps3, shift=m_e - 2 * W, axis=0)[:m].astype(cdt),
                w2_ref[2], preferred_element_type=f32)

        # --- bias + LeakyReLU + residual add ----------------------------------
        y2 = y2 + b2_ref[...]
        y2 = jnp.maximum(y2, 0.1 * y2)
        o_ref[...] = (xc_ref[...].astype(f32) + y2.reshape(TH, W, C)).astype(o_ref.dtype)

    return kernel


def _divisors(n):
    return [d for d in range(1, n + 1) if n % d == 0]


def _pick_row_tile(N, H, W, C, C2, x_itemsize, tile_budget_bytes, min_steps=8):
    """Largest divisor of H whose per-step live bytes fit the VMEM budget while
    keeping at least `min_steps` grid steps (pipelining depth / v7x 2-TC sharding)."""

    def step_bytes(th):
        m = th * W
        m_e = (th + 2) * W
        io = 2 * (m * C + 2 * W * C + m * C) * x_itemsize   # double-buffered x/halo/out tiles
        h1 = m_e * C2 * 4                                    # f32 1x1 activations (+ halos)
        taps = 4 * m_e * 3 * C2 * 4                          # taps3 + rolled copies (f32, upper bound)
        lhs = m * 9 * C2 * 2                                 # bf16 MXU operands
        y = 2 * m * C * 4                                    # f32 conv-2 result + residual sum
        return io + h1 + taps + lhs + y

    fitting = [d for d in _divisors(H) if step_bytes(d) <= tile_budget_bytes]
    if not fitting:
        return 1
    deep = [d for d in fitting if N * (H // d) >= min_steps]
    # If even TH=1 cannot give `min_steps`, the problem is tiny -> minimize steps.
    return max(deep) if deep else max(fitting)


def residual_block(x_nhwc, w1_cc2, s1, b1, w2_hwio, s2, b2,
                   *, row_tile=None, compute_dtype=jnp.bfloat16, fuse_kh=None):
    N, H, W, C = x_nhwc.shape
    C2 = w1_cc2.shape[1]

    # Fuse the three kh matmuls into one K = 9*C2 dot on shallow stages.
    if fuse_kh is None:
        fuse_kh = 3 * C2 < 256

    # Fold BN scales into the conv weights once in f32 (single bf16 rounding);
    # per-channel biases stay in the f32 epilogue.
    w1f = (w1_cc2.astype(jnp.float32) * s1[None, :]).astype(compute_dtype)   # (C, C2)
    w2_s = w2_hwio.astype(jnp.float32) * s2[None, None, None, :]             # (3,3,C2,C)
    if fuse_kh:
        w2f = w2_s.reshape(9 * C2, C).astype(compute_dtype)                  # (9*C2, C)
        w2_spec = pl.BlockSpec((9 * C2, C), lambda n, r: (0, 0),
                               pipeline_mode=pl.Buffered(1))
    else:
        w2f = w2_s.reshape(3, 3 * C2, C).astype(compute_dtype)               # (3, 3*C2, C)
        w2_spec = pl.BlockSpec((3, 3 * C2, C), lambda n, r: (0, 0, 0),
                               pipeline_mode=pl.Buffered(1))
    b1f = b1.reshape(1, C2).astype(jnp.float32)
    b2f = b2.reshape(1, C).astype(jnp.float32)

    # Generation-aware VMEM budgeting: ~3/4 of physical per-core VMEM
    # (48 MiB on v7x's 64 MiB, 96 MiB on v5e/v6e's 128 MiB).
    try:
        vmem_cap = int(pltpu.get_tpu_info().vmem_capacity_bytes)
    except Exception:
        vmem_cap = 64 * 1024 * 1024   # v7x-safe fallback
    vmem_limit = min(vmem_cap * 3 // 4, 112 * 1024 * 1024)
    weight_bytes = ((w1f.size + w2f.size) * jnp.dtype(compute_dtype).itemsize
                    + (b1f.size + b2f.size) * 4)
    tile_budget = max(vmem_limit - weight_bytes - 4 * 1024 * 1024, 4 * 1024 * 1024)

    TH = row_tile if row_tile is not None else _pick_row_tile(
        N, H, W, C, C2, x_nhwc.dtype.itemsize, tile_budget)
    assert H % TH == 0

    cost = pl.CostEstimate(
        flops=20 * N * H * W * C * C2,   # 2*C*C2 (1x1) + 18*C2*C (3x3) per pixel
        transcendentals=0,
        bytes_accessed=2 * N * H * W * C * x_nhwc.dtype.itemsize
        + w1f.size * 2 + w2f.size * 2 + (b1f.size + b2f.size) * 4,
    )

    wspec1 = pl.BlockSpec((C, C2), lambda n, r: (0, 0), pipeline_mode=pl.Buffered(1))
    bspec1 = pl.BlockSpec((1, C2), lambda n, r: (0, 0), pipeline_mode=pl.Buffered(1))
    bspec2 = pl.BlockSpec((1, C), lambda n, r: (0, 0), pipeline_mode=pl.Buffered(1))

    return pl.pallas_call(
        _make_kernel(fuse_kh),
        out_shape=jax.ShapeDtypeStruct((N, H, W, C), x_nhwc.dtype),
        grid=(N, H // TH),
        in_specs=[
            # row tile of x (also the residual term)
            pl.BlockSpec((pl.Squeezed(), TH, W, C), lambda n, r: (n, r, 0, 0)),
            # 1-row halos above / below (index-clamped; zeroed in-kernel at edges)
            pl.BlockSpec((pl.Squeezed(), 1, W, C),
                         lambda n, r: (n, jnp.maximum(r * TH - 1, 0), 0, 0)),
            pl.BlockSpec((pl.Squeezed(), 1, W, C),
                         lambda n, r: (n, jnp.minimum(r * TH + TH, H - 1), 0, 0)),
            wspec1, bspec1, w2_spec, bspec2,
        ],
        out_specs=pl.BlockSpec((pl.Squeezed(), TH, W, C), lambda n, r: (n, r, 0, 0)),
        compiler_params=pltpu.CompilerParams(
            dimension_semantics=("parallel", "parallel"),
            vmem_limit_bytes=int(vmem_limit)),
        cost_estimate=cost,
    )(x_nhwc, x_nhwc, x_nhwc, w1f, b1f, w2f, b2f)


def ref_forward(x_nhwc, w1_hwio, s1, b1, w2_hwio, s2, b2):
    """Pure-JAX f32 reference (eval-mode BN applied after each conv)."""
    dn = ('NHWC', 'HWIO', 'NHWC')
    y = lax.conv_general_dilated(x_nhwc, w1_hwio, (1, 1), 'VALID',
                                 dimension_numbers=dn)
    y = y * s1 + b1
    y = jnp.where(y > 0, y, 0.1 * y)
    y = lax.conv_general_dilated(y, w2_hwio, (1, 1), ((1, 1), (1, 1)),
                                 dimension_numbers=dn)
    y = y * s2 + b2
    y = jnp.where(y > 0, y, 0.1 * y)
    return x_nhwc + y


if __name__ == "__main__":
    N, C, H, W = 2, 4, 16, 16
    C2 = C // 2
    eps = 1e-5

    key = jax.random.PRNGKey(0)
    k = iter(jax.random.split(key, 12))

    # Deterministic "PyTorch-style" parameter init.
    w1_pt = jax.random.normal(next(k), (C2, C, 1, 1), jnp.float32) * 0.1   # OIHW
    w2_pt = jax.random.normal(next(k), (C, C2, 3, 3), jnp.float32) * 0.1   # OIHW
    g1 = 1.0 + 0.1 * jax.random.normal(next(k), (C2,), jnp.float32)
    be1 = 0.1 * jax.random.normal(next(k), (C2,), jnp.float32)
    rm1 = 0.1 * jax.random.normal(next(k), (C2,), jnp.float32)
    rv1 = jnp.abs(jax.random.normal(next(k), (C2,), jnp.float32)) + 0.5
    g2 = 1.0 + 0.1 * jax.random.normal(next(k), (C,), jnp.float32)
    be2 = 0.1 * jax.random.normal(next(k), (C,), jnp.float32)
    rm2 = 0.1 * jax.random.normal(next(k), (C,), jnp.float32)
    rv2 = jnp.abs(jax.random.normal(next(k), (C,), jnp.float32)) + 0.5

    # Fold BN (eval mode) into per-channel scale / bias.
    s1 = g1 / jnp.sqrt(rv1 + eps)
    b1 = be1 - rm1 * s1
    s2 = g2 / jnp.sqrt(rv2 + eps)
    b2 = be2 - rm2 * s2

    # Re-layout weights for the kernel / reference.
    w1_hwio = jnp.transpose(w1_pt, (2, 3, 1, 0))          # (1,1,C,C2)
    w1_cc2 = w1_hwio.reshape(C, C2)                        # (C, C2) for matmul
    w2_hwio = jnp.transpose(w2_pt, (2, 3, 1, 0))          # (3,3,C2,C)

    x_nchw = jax.random.normal(next(k), (N, C, H, W), jnp.float32)
    x_nhwc = jnp.transpose(x_nchw, (0, 2, 3, 1))          # NCHW -> NHWC

    ref = ref_forward(x_nhwc, w1_hwio, s1, b1, w2_hwio, s2, b2)

    # 1) Default config: auto row tile (VMEM-budgeted), fused K=9*C2 path.
    out = jax.block_until_ready(
        residual_block(x_nhwc, w1_cc2, s1, b1, w2_hwio, s2, b2))
    assert jnp.allclose(out, ref, atol=5e-2, rtol=5e-2), \
        float(jnp.max(jnp.abs(out - ref)))

    # 2) Deep-stage configuration: 3-dot (K=3*C2) path, explicit row tile.
    out3 = jax.block_until_ready(residual_block(
        x_nhwc, w1_cc2, s1, b1, w2_hwio, s2, b2, row_tile=8, fuse_kh=False))
    assert jnp.allclose(out3, ref, atol=5e-2, rtol=5e-2), \
        float(jnp.max(jnp.abs(out3 - ref)))

    # 3) bf16 at the pallas_call boundary (memory-bound-stage configuration;
    #    epilogue math stays f32 in-kernel).
    out_bf = jax.block_until_ready(residual_block(
        x_nhwc.astype(jnp.bfloat16), w1_cc2, s1, b1, w2_hwio, s2, b2))
    assert jnp.allclose(out_bf.astype(jnp.float32), ref, atol=1e-1, rtol=1e-1), \
        float(jnp.max(jnp.abs(out_bf.astype(jnp.float32) - ref)))

    print("KERNEL_OK")
</pallas_src>

<mosaic_0001>
module attributes {stable_mosaic.version = 11 : i64} {
  func.func @kernel(%arg0: i32, %arg1: i32, %arg2: memref<1x4x16x4xf32, #tpu.memory_space<vmem>>, %arg3: memref<1x1x16x4xf32, #tpu.memory_space<vmem>>, %arg4: memref<1x1x16x4xf32, #tpu.memory_space<vmem>>, %arg5: memref<4x2xbf16, #tpu.memory_space<vmem>>, %arg6: memref<1x2xf32, #tpu.memory_space<vmem>>, %arg7: memref<18x4xbf16, #tpu.memory_space<vmem>>, %arg8: memref<1x4xf32, #tpu.memory_space<vmem>>, %arg9: memref<1x4x16x4xf32, #tpu.memory_space<vmem>>) attributes {dimension_semantics = [#tpu.dimension_semantics<parallel>, #tpu.dimension_semantics<parallel>], iteration_bounds = array<i64: 2, 4>, scalar_prefetch = 0 : i64, scratch_operands = 0 : i64, tpu.core_type = #tpu.core_type<tc>, window_params = [{transform_indices = @transform_0, window_bounds = array<i64: 1, 4, 16, 4>}, {transform_indices = @transform_1, window_bounds = array<i64: 1, 1, 16, 4>}, {transform_indices = @transform_2, window_bounds = array<i64: 1, 1, 16, 4>}, {pipeline_mode = #tpu.pipeline_mode<synchronous>, transform_indices = @transform_3, window_bounds = array<i64: 4, 2>}, {pipeline_mode = #tpu.pipeline_mode<synchronous>, transform_indices = @transform_4, window_bounds = array<i64: 1, 2>}, {pipeline_mode = #tpu.pipeline_mode<synchronous>, transform_indices = @transform_5, window_bounds = array<i64: 18, 4>}, {pipeline_mode = #tpu.pipeline_mode<synchronous>, transform_indices = @transform_6, window_bounds = array<i64: 1, 4>}, {transform_indices = @transform_7, window_bounds = array<i64: 1, 4, 16, 4>}]} {
    %c0 = arith.constant 0 : index
    %c0_0 = arith.constant 0 : index
    %0 = vector.load %arg5[%c0, %c0_0] : memref<4x2xbf16, #tpu.memory_space<vmem>>, vector<4x2xbf16>
    %c0_1 = arith.constant 0 : index
    %c0_2 = arith.constant 0 : index
    %1 = vector.load %arg6[%c0_1, %c0_2] : memref<1x2xf32, #tpu.memory_space<vmem>>, vector<1x2xf32>
    %c0_3 = arith.constant 0 : index
    %c0_4 = arith.constant 0 : index
    %c0_5 = arith.constant 0 : index
    %c0_6 = arith.constant 0 : index
    %2 = vector.load %arg2[%c0_3, %c0_4, %c0_5, %c0_6] : memref<1x4x16x4xf32, #tpu.memory_space<vmem>>, vector<1x4x16x4xf32>
    %3 = vector.shape_cast %2 : vector<1x4x16x4xf32> to vector<4x16x4xf32>
    %4 = vector.shape_cast %3 : vector<4x16x4xf32> to vector<64x4xf32>
    %5 = arith.truncf %4 : vector<64x4xf32> to vector<64x4xbf16>
    %cst = arith.constant dense<0.000000e+00> : vector<64x2xf32>
    %6 = tpu.matmul %5, %0, %cst {dimension_numbers = #tpu.dot_dimension_numbers<[1], [0], [0], [1], [0, 0, 1, 1], [], []>} : vector<64x4xbf16>, vector<4x2xbf16>, vector<64x2xf32> -> vector<64x2xf32>
    %7 = vector.broadcast %1 : vector<1x2xf32> to vector<64x2xf32>
    %8 = arith.addf %6, %7 : vector<64x2xf32>
    %cst_7 = arith.constant 1.000000e-01 : f32
    %9 = vector.broadcast %cst_7 : f32 to vector<64x2xf32>
    %10 = arith.mulf %9, %8 : vector<64x2xf32>
    %11 = arith.maximumf %8, %10 : vector<64x2xf32>
    %c0_8 = arith.constant 0 : index
    %c0_9 = arith.constant 0 : index
    %c0_10 = arith.constant 0 : index
    %c0_11 = arith.constant 0 : index
    %12 = vector.load %arg3[%c0_8, %c0_9, %c0_10, %c0_11] : memref<1x1x16x4xf32, #tpu.memory_space<vmem>>, vector<1x1x16x4xf32>
    %13 = vector.shape_cast %12 : vector<1x1x16x4xf32> to vector<1x16x4xf32>
    %14 = vector.shape_cast %13 : vector<1x16x4xf32> to vector<16x4xf32>
    %15 = arith.truncf %14 : vector<16x4xf32> to vector<16x4xbf16>
    %cst_12 = arith.constant dense<0.000000e+00> : vector<16x2xf32>
    %16 = tpu.matmul %15, %0, %cst_12 {dimension_numbers = #tpu.dot_dimension_numbers<[1], [0], [0], [1], [0, 0, 1, 1], [], []>} : vector<16x4xbf16>, vector<4x2xbf16>, vector<16x2xf32> -> vector<16x2xf32>
    %17 = vector.broadcast %1 : vector<1x2xf32> to vector<16x2xf32>
    %18 = arith.addf %16, %17 : vector<16x2xf32>
    %cst_13 = arith.constant 1.000000e-01 : f32
    %19 = vector.broadcast %cst_13 : f32 to vector<16x2xf32>
    %20 = arith.mulf %19, %18 : vector<16x2xf32>
    %21 = arith.maximumf %18, %20 : vector<16x2xf32>
    %c0_i32 = arith.constant 0 : i32
    %22 = arith.cmpi eq, %arg1, %c0_i32 : i32
    %cst_14 = arith.constant 0.000000e+00 : f32
    %cst_15 = arith.constant 1.000000e+00 : f32
    %23 = arith.select %22, %cst_14, %cst_15 : f32
    %24 = vector.broadcast %23 : f32 to vector<16x2xf32>
    %25 = arith.mulf %21, %24 : vector<16x2xf32>
    %c0_16 = arith.constant 0 : index
    %c0_17 = arith.constant 0 : index
    %c0_18 = arith.constant 0 : index
    %c0_19 = arith.constant 0 : index
    %26 = vector.load %arg4[%c0_16, %c0_17, %c0_18, %c0_19] : memref<1x1x16x4xf32, #tpu.memory_space<vmem>>, vector<1x1x16x4xf32>
    %27 = vector.shape_cast %26 : vector<1x1x16x4xf32> to vector<1x16x4xf32>
    %28 = vector.shape_cast %27 : vector<1x16x4xf32> to vector<16x4xf32>
    %29 = arith.truncf %28 : vector<16x4xf32> to vector<16x4xbf16>
    %cst_20 = arith.constant dense<0.000000e+00> : vector<16x2xf32>
    %30 = tpu.matmul %29, %0, %cst_20 {dimension_numbers = #tpu.dot_dimension_numbers<[1], [0], [0], [1], [0, 0, 1, 1], [], []>} : vector<16x4xbf16>, vector<4x2xbf16>, vector<16x2xf32> -> vector<16x2xf32>
    %31 = vector.broadcast %1 : vector<1x2xf32> to vector<16x2xf32>
    %32 = arith.addf %30, %31 : vector<16x2xf32>
    %cst_21 = arith.constant 1.000000e-01 : f32
    %33 = vector.broadcast %cst_21 : f32 to vector<16x2xf32>
    %34 = arith.mulf %33, %32 : vector<16x2xf32>
    %35 = arith.maximumf %32, %34 : vector<16x2xf32>
    %c3_i32 = arith.constant 3 : i32
    %36 = arith.cmpi eq, %arg1, %c3_i32 : i32
    %cst_22 = arith.constant 0.000000e+00 : f32
    %cst_23 = arith.constant 1.000000e+00 : f32
    %37 = arith.select %36, %cst_22, %cst_23 : f32
    %38 = vector.broadcast %37 : f32 to vector<16x2xf32>
    %39 = arith.mulf %35, %38 : vector<16x2xf32>
    %40 = tpu.concatenate %25, %11, %39 in 0 : vector<16x2xf32>, vector<64x2xf32>, vector<16x2xf32> -> vector<96x2xf32>
    %41 = tpu.iota {dimensions = array<i32: 1>} : vector<6x16x1xi32>
    %42 = vector.shape_cast %41 : vector<6x16x1xi32> to vector<96x1xi32>
    %c0_i32_24 = arith.constant 0 : i32
    %43 = vector.broadcast %c0_i32_24 : i32 to vector<96x1xi32>
    %44 = arith.cmpi eq, %42, %43 : vector<96x1xi32>
    %c1_i32 = arith.constant 1 : i32
    %45 = tpu.dynamic_rotate %40 by %c1_i32 dim 0 : vector<96x2xf32>, i32 -> vector<96x2xf32>
    %cst_25 = arith.constant 0.000000e+00 : f32
    %46 = vector.shape_cast %44 : vector<96x1xi1> to vector<96x1xi1>
    %47 = vector.broadcast %46 : vector<96x1xi1> to vector<96x2xi1>
    %48 = vector.broadcast %cst_25 : f32 to vector<96x2xf32>
    %49 = arith.select %47, %48, %45 : vector<96x2xi1>, vector<96x2xf32>
    %c15_i32 = arith.constant 15 : i32
    %50 = vector.broadcast %c15_i32 : i32 to vector<96x1xi32>
    %51 = arith.cmpi eq, %42, %50 : vector<96x1xi32>
    %c95_i32 = arith.constant 95 : i32
    %52 = tpu.dynamic_rotate %40 by %c95_i32 dim 0 : vector<96x2xf32>, i32 -> vector<96x2xf32>
    %cst_26 = arith.constant 0.000000e+00 : f32
    %53 = vector.shape_cast %51 : vector<96x1xi1> to vector<96x1xi1>
    %54 = vector.broadcast %53 : vector<96x1xi1> to vector<96x2xi1>
    %55 = vector.broadcast %cst_26 : f32 to vector<96x2xf32>
    %56 = arith.select %54, %55, %52 : vector<96x2xi1>, vector<96x2xf32>
    %57 = tpu.concatenate %49, %40, %56 in 1 : vector<96x2xf32>, vector<96x2xf32>, vector<96x2xf32> -> vector<96x6xf32>
    %c80_i32 = arith.constant 80 : i32
    %58 = tpu.dynamic_rotate %57 by %c80_i32 dim 0 : vector<96x6xf32>, i32 -> vector<96x6xf32>
    %c64_i32 = arith.constant 64 : i32
    %59 = tpu.dynamic_rotate %57 by %c64_i32 dim 0 : vector<96x6xf32>, i32 -> vector<96x6xf32>
    %60 = tpu.concatenate %57, %58, %59 in 1 : vector<96x6xf32>, vector<96x6xf32>, vector<96x6xf32> -> vector<96x18xf32>
    %61 = vector.extract_strided_slice %60 {offsets = [0, 0], sizes = [64, 18], strides = [1, 1]} : vector<96x18xf32> to vector<64x18xf32>
    %62 = arith.truncf %61 : vector<64x18xf32> to vector<64x18xbf16>
    %c0_27 = arith.constant 0 : index
    %c0_28 = arith.constant 0 : index
    %63 = vector.load %arg7[%c0_27, %c0_28] : memref<18x4xbf16, #tpu.memory_space<vmem>>, vector<18x4xbf16>
    %cst_29 = arith.constant dense<0.000000e+00> : vector<64x4xf32>
    %64 = tpu.matmul %62, %63, %cst_29 {dimension_numbers = #tpu.dot_dimension_numbers<[1], [0], [0], [1], [0, 0, 1, 1], [], []>} : vector<64x18xbf16>, vector<18x4xbf16>, vector<64x4xf32> -> vector<64x4xf32>
    %c0_30 = arith.constant 0 : index
    %c0_31 = arith.constant 0 : index
    %65 = vector.load %arg8[%c0_30, %c0_31] : memref<1x4xf32, #tpu.memory_space<vmem>>, vector<1x4xf32>
    %66 = vector.broadcast %65 : vector<1x4xf32> to vector<64x4xf32>
    %67 = arith.addf %64, %66 : vector<64x4xf32>
    %cst_32 = arith.constant 1.000000e-01 : f32
    %68 = vector.broadcast %cst_32 : f32 to vector<64x4xf32>
    %69 = arith.mulf %68, %67 : vector<64x4xf32>
    %70 = arith.maximumf %67, %69 : vector<64x4xf32>
    %c0_33 = arith.constant 0 : index
    %c0_34 = arith.constant 0 : index
    %c0_35 = arith.constant 0 : index
    %c0_36 = arith.constant 0 : index
    %71 = vector.load %arg2[%c0_33, %c0_34, %c0_35, %c0_36] : memref<1x4x16x4xf32, #tpu.memory_space<vmem>>, vector<1x4x16x4xf32>
    %72 = vector.shape_cast %71 : vector<1x4x16x4xf32> to vector<4x16x4xf32>
    %73 = vector.shape_cast %70 : vector<64x4xf32> to vector<4x16x4xf32>
    %74 = arith.addf %72, %73 : vector<4x16x4xf32>
    %c0_37 = arith.constant 0 : index
    %c0_38 = arith.constant 0 : index
    %c0_39 = arith.constant 0 : index
    %c0_40 = arith.constant 0 : index
    %75 = vector.load %arg9[%c0_37, %c0_38, %c0_39, %c0_40] : memref<1x4x16x4xf32, #tpu.memory_space<vmem>>, vector<1x4x16x4xf32>
    %76 = vector.shape_cast %75 : vector<1x4x16x4xf32> to vector<4x16x4xf32>
    %77 = vector.shape_cast %74 : vector<4x16x4xf32> to vector<1x4x16x4xf32>
    tpu.vector_store %arg9[%c0_37, %c0_38, %c0_39, %c0_40], %77 {strides = array<i32>} : memref<1x4x16x4xf32, #tpu.memory_space<vmem>>, vector<1x4x16x4xf32>,
    return
  }
  func.func @transform_0(%arg0: i32, %arg1: i32) -> (i32, i32, i32, i32) {
    %c0_i32 = arith.constant 0 : i32
    %c0_i32_0 = arith.constant 0 : i32
    %c0_i32_1 = arith.constant 0 : i32
    return %arg0, %arg1, %c0_i32, %c0_i32_0 : i32, i32, i32, i32
  }
  func.func @transform_1(%arg0: i32, %arg1: i32) -> (i32, i32, i32, i32) {
    %c4_i32 = arith.constant 4 : i32
    %0 = arith.muli %arg1, %c4_i32 : i32
    %c1_i32 = arith.constant 1 : i32
    %1 = arith.subi %0, %c1_i32 : i32
    %c0_i32 = arith.constant 0 : i32
    %2 = arith.maxsi %1, %c0_i32 : i32
    %c0_i32_0 = arith.constant 0 : i32
    %c0_i32_1 = arith.constant 0 : i32
    %c0_i32_2 = arith.constant 0 : i32
    return %arg0, %2, %c0_i32_0, %c0_i32_1 : i32, i32, i32, i32
  }
  func.func @transform_2(%arg0: i32, %arg1: i32) -> (i32, i32, i32, i32) {
    %c4_i32 = arith.constant 4 : i32
    %0 = arith.muli %arg1, %c4_i32 : i32
    %c4_i32_0 = arith.constant 4 : i32
    %1 = arith.addi %0, %c4_i32_0 : i32
    %c15_i32 = arith.constant 15 : i32
    %2 = arith.minsi %1, %c15_i32 : i32
    %c0_i32 = arith.constant 0 : i32
    %c0_i32_1 = arith.constant 0 : i32
    %c0_i32_2 = arith.constant 0 : i32
    return %arg0, %2, %c0_i32, %c0_i32_1 : i32, i32, i32, i32
  }
  func.func @transform_3(%arg0: i32, %arg1: i32) -> (i32, i32) {
    %c0_i32 = arith.constant 0 : i32
    %c0_i32_0 = arith.constant 0 : i32
    %c0_i32_1 = arith.constant 0 : i32
    return %c0_i32, %c0_i32_0 : i32, i32
  }
  func.func @transform_4(%arg0: i32, %arg1: i32) -> (i32, i32) {
    %c0_i32 = arith.constant 0 : i32
    %c0_i32_0 = arith.constant 0 : i32
    %c0_i32_1 = arith.constant 0 : i32
    return %c0_i32, %c0_i32_0 : i32, i32
  }
  func.func @transform_5(%arg0: i32, %arg1: i32) -> (i32, i32) {
    %c0_i32 = arith.constant 0 : i32
    %c0_i32_0 = arith.constant 0 : i32
    %c0_i32_1 = arith.constant 0 : i32
    return %c0_i32, %c0_i32_0 : i32, i32
  }
  func.func @transform_6(%arg0: i32, %arg1: i32) -> (i32, i32) {
    %c0_i32 = arith.constant 0 : i32
    %c0_i32_0 = arith.constant 0 : i32
    %c0_i32_1 = arith.constant 0 : i32
    return %c0_i32, %c0_i32_0 : i32, i32
  }
  func.func @transform_7(%arg0: i32, %arg1: i32) -> (i32, i32, i32, i32) {
    %c0_i32 = arith.constant 0 : i32
    %c0_i32_0 = arith.constant 0 : i32
    %c0_i32_1 = arith.constant 0 : i32
    return %arg0, %arg1, %c0_i32, %c0_i32_0 : i32, i32, i32, i32
  }
}

</mosaic_0001>

<llo_original>
// kernel: tpu_custom_call.1
$region0: #{tpu_custom_call.1}
  #allocation0 [shape = 'u32[]', space=smem, size = 0x4, offset = 0x4, fixed_abs, tag = 'smem constant byte address 0x4 - core index']
  #allocation1 [shape = 'u32[144,128]{1,0:T(1,128)}', space=vmem, size = 0x12000, scoped, tag = 'internal scratch']
  %s0 = inlined_call_operand.vmem [shape: f32[2,16,16,4], index: 0, kind: input, shape index: {}]
  %s1 = inlined_call_operand.vmem [shape: f32[2,16,16,4], index: 1, kind: input, shape index: {}]
  %s2 = inlined_call_operand.vmem [shape: f32[2,16,16,4], index: 2, kind: input, shape index: {}]
  %s3 = inlined_call_operand.vmem [shape: bf16[4,2], index: 3, kind: input, shape index: {}]
  %s4 = inlined_call_operand.vmem [shape: f32[1,2], index: 4, kind: input, shape index: {}]
  %s5 = inlined_call_operand.vmem [shape: bf16[18,4], index: 5, kind: input, shape index: {}]
  %s6 = inlined_call_operand.vmem [shape: f32[1,4], index: 6, kind: input, shape index: {}]
  %s7 = inlined_call_operand.vmem [shape: f32[2,16,16,4], index: 7, kind: output, shape index: {}]
  %s8 = sld [smem:[#allocation0]]
  $region61: #{tpu_custom_call.1} parent=0
    _
  %s10 = ssub.s32 1, %s8
  %s11 = scalar_select 0, %s10, %s8
  loop: start=0, step=1, limit=10
  $region2: #{tpu_custom_call.1} parent=0 // loop_pre_header
    _
  $region3: #{tpu_custom_call.1} parent=0 // loop_header
    %s13 = sphi 0, %s17
    %p14 = scmp.ge.s32.totalorder %s13, 10
    %s20 = sphi 0, %s32
    %s21 = sphi 0, %s28
    %s22 = sphi 0, %s20
    %s23 = sphi 0, %s21
    %s24 = sphi 0, %s22
    %s25 = sphi 0, %s23
    %s37 = sphi 0, %s39
    %s40 = sphi 0, %s37
    %s41 = sphi 0, %s40
    %s57 = sphi 0, %s41
    %s73 = sphi 0, %s75
    %s76 = sphi 0, %s73
    %s77 = sphi 0, %s76
    %s93 = sphi 0, %s77
    %s109 = sphi 0, %s111
    %s112 = sphi 0, %s109
    %s113 = sphi 0, %s112
    %s129 = sphi 0, %s113
    %s133 = sphi 0, %s133
    %s135 = sphi 0, %s133
    %s136 = sphi 0, %s135
    %s150 = sphi 0, %s136
    %s154 = sphi 0, %s154
    %s156 = sphi 0, %s154
    %s157 = sphi 0, %s156
    %s171 = sphi 0, %s157
    %s175 = sphi 0, %s175
    %s177 = sphi 0, %s175
    %s178 = sphi 0, %s177
    %s192 = sphi 0, %s178
    %s196 = sphi 0, %s196
    %s198 = sphi 0, %s196
    %s199 = sphi 0, %s198
    %s213 = sphi 0, %s199
    %s221 = sphi 0, %s223
    %s224 = sphi 0, %s221
    %s225 = sphi 0, %s224
    %s241 = sphi 0, %s225
  $region4: #{tpu_custom_call.1} parent=0 // loop_header_branch
    %16 = sbr.rel (%p14) target = $region8
  $region5: #{tpu_custom_call.1} parent=0 // loop_body
    %s18 = ssub.s32 %s13, 1
    %s19 = ssub.s32 %s13, 2
    %s26 = sadd.s32 1, %s21
    %p27 = scmp.ge.s32.totalorder %s26, 4
    %s28 = scalar_select %p27, 0, %s26
    %s29 = sadd.s32 1, %s20
    %s30 = scalar_select %p27, %s29, %s20
    %p31 = scmp.ge.s32.totalorder %s30, 2
    %s32 = scalar_select %p31, 0, %s30
    %s33 = ssub.s32 %s20, %s32
    %s34 = ssub.s32 %s21, %s28
    %s35 = sor.u32 %s33, %s34
    %p36 = scmp.eq.s32.totalorder %s35, 0
    %s38 = sadd.s32 %s37, 1
    %s39 = scalar_select %p36, %s37, %s38
    %p42 = pneg %p36
    %p43 = scmp.eq.s32.totalorder %s13, 7
    %p44 = por %p42, %p43
    %p45 = scmp.ne.s32.totalorder %s37, %s40
    %p46 = scmp.eq.s32.totalorder %s13, 0
    %p47 = por %p45, %p46
    %p48 = scmp.ne.s32.totalorder %s37, %s40
    %p49 = scmp.eq.s32.totalorder %s18, 7
    %p50 = por %p48, %p49
    %p51 = scmp.ne.s32.totalorder %s40, %s41
    %p52 = scmp.eq.s32.totalorder %s18, 0
    %p53 = por %p51, %p52
    %p54 = scmp.ne.s32.totalorder %s40, %s41
    %p55 = scmp.eq.s32.totalorder %s19, 7
    %p56 = por %p54, %p55
    %p58 = scmp.ne.s32.totalorder %s41, %s57
    %p59 = scmp.eq.s32.totalorder %s19, 0
    %p60 = por %p58, %p59
    %s61 = smul.u32 %s21, 4
    %s62 = ssub.s32 %s61, 1
    %p63 = scmp.gt.s32.totalorder %s62, 0
    %s64 = scalar_select %p63, %s62, 0
    %s65 = smul.u32 %s28, 4
    %s66 = ssub.s32 %s65, 1
    %p67 = scmp.gt.s32.totalorder %s66, 0
    %s68 = scalar_select %p67, %s66, 0
    %s69 = ssub.s32 %s20, %s32
    %s70 = ssub.s32 %s64, %s68
    %s71 = sor.u32 %s69, %s70
    %p72 = scmp.eq.s32.totalorder %s71, 0
    %s74 = sadd.s32 %s73, 1
    %s75 = scalar_select %p72, %s73, %s74
    %p78 = pneg %p72
    %p79 = scmp.eq.s32.totalorder %s13, 7
    %p80 = por %p78, %p79
    %p81 = scmp.ne.s32.totalorder %s73, %s76
    %p82 = scmp.eq.s32.totalorder %s13, 0
    %p83 = por %p81, %p82
    %p84 = scmp.ne.s32.totalorder %s73, %s76
    %p85 = scmp.eq.s32.totalorder %s18, 7
    %p86 = por %p84, %p85
    %p87 = scmp.ne.s32.totalorder %s76, %s77
    %p88 = scmp.eq.s32.totalorder %s18, 0
    %p89 = por %p87, %p88
    %p90 = scmp.ne.s32.totalorder %s76, %s77
    %p91 = scmp.eq.s32.totalorder %s19, 7
    %p92 = por %p90, %p91
    %p94 = scmp.ne.s32.totalorder %s77, %s93
    %p95 = scmp.eq.s32.totalorder %s19, 0
    %p96 = por %p94, %p95
    %s97 = smul.u32 %s21, 4
    %s98 = sadd.s32 %s97, 4
    %p99 = scmp.lt.s32.totalorder %s98, 15
    %s100 = scalar_select %p99, %s98, 15
    %s101 = smul.u32 %s28, 4
    %s102 = sadd.s32 %s101, 4
    %p103 = scmp.lt.s32.totalorder %s102, 15
    %s104 = scalar_select %p103, %s102, 15
    %s105 = ssub.s32 %s20, %s32
    %s106 = ssub.s32 %s100, %s104
    %s107 = sor.u32 %s105, %s106
    %p108 = scmp.eq.s32.totalorder %s107, 0
    %s110 = sadd.s32 %s109, 1
    %s111 = scalar_select %p108, %s109, %s110
    %p114 = pneg %p108
    %p115 = scmp.eq.s32.totalorder %s13, 7
    %p116 = por %p114, %p115
    %p117 = scmp.ne.s32.totalorder %s109, %s112
    %p118 = scmp.eq.s32.totalorder %s13, 0
    %p119 = por %p117, %p118
    %p120 = scmp.ne.s32.totalorder %s109, %s112
    %p121 = scmp.eq.s32.totalorder %s18, 7
    %p122 = por %p120, %p121
    %p123 = scmp.ne.s32.totalorder %s112, %s113
    %p124 = scmp.eq.s32.totalorder %s18, 0
    %p125 = por %p123, %p124
    %p126 = scmp.ne.s32.totalorder %s112, %s113
    %p127 = scmp.eq.s32.totalorder %s19, 7
    %p128 = por %p126, %p127
    %p130 = scmp.ne.s32.totalorder %s113, %s129
    %p131 = scmp.eq.s32.totalorder %s19, 0
    %p132 = por %p130, %p131
    %s134 = sadd.s32 %s133, 1
    %p137 = scmp.eq.s32.totalorder %s13, 7
    %p138 = scmp.ne.s32.totalorder %s133, %s135
    %p139 = scmp.eq.s32.totalorder %s13, 0
    %p140 = por %p138, %p139
    %p141 = scmp.ne.s32.totalorder %s133, %s135
    %p142 = scmp.eq.s32.totalorder %s18, 7
    %p143 = por %p141, %p142
    %p144 = scmp.ne.s32.totalorder %s135, %s136
    %p145 = scmp.eq.s32.totalorder %s18, 0
    %p146 = por %p144, %p145
    %p147 = scmp.ne.s32.totalorder %s135, %s136
    %p148 = scmp.eq.s32.totalorder %s19, 7
    %p149 = por %p147, %p148
    %p151 = scmp.ne.s32.totalorder %s136, %s150
    %p152 = scmp.eq.s32.totalorder %s19, 0
    %p153 = por %p151, %p152
    %s155 = sadd.s32 %s154, 1
    %p158 = scmp.eq.s32.totalorder %s13, 7
    %p159 = scmp.ne.s32.totalorder %s154, %s156
    %p160 = scmp.eq.s32.totalorder %s13, 0
    %p161 = por %p159, %p160
    %p162 = scmp.ne.s32.totalorder %s154, %s156
    %p163 = scmp.eq.s32.totalorder %s18, 7
    %p164 = por %p162, %p163
    %p165 = scmp.ne.s32.totalorder %s156, %s157
    %p166 = scmp.eq.s32.totalorder %s18, 0
    %p167 = por %p165, %p166
    %p168 = scmp.ne.s32.totalorder %s156, %s157
    %p169 = scmp.eq.s32.totalorder %s19, 7
    %p170 = por %p168, %p169
    %p172 = scmp.ne.s32.totalorder %s157, %s171
    %p173 = scmp.eq.s32.totalorder %s19, 0
    %p174 = por %p172, %p173
    %s176 = sadd.s32 %s175, 1
    %p179 = scmp.eq.s32.totalorder %s13, 7
    %p180 = scmp.ne.s32.totalorder %s175, %s177
    %p181 = scmp.eq.s32.totalorder %s13, 0
    %p182 = por %p180, %p181
    %p183 = scmp.ne.s32.totalorder %s175, %s177
    %p184 = scmp.eq.s32.totalorder %s18, 7
    %p185 = por %p183, %p184
    %p186 = scmp.ne.s32.totalorder %s177, %s178
    %p187 = scmp.eq.s32.totalorder %s18, 0
    %p188 = por %p186, %p187
    %p189 = scmp.ne.s32.totalorder %s177, %s178
    %p190 = scmp.eq.s32.totalorder %s19, 7
    %p191 = por %p189, %p190
    %p193 = scmp.ne.s32.totalorder %s178, %s192
    %p194 = scmp.eq.s32.totalorder %s19, 0
    %p195 = por %p193, %p194
    %s197 = sadd.s32 %s196, 1
    %p200 = scmp.eq.s32.totalorder %s13, 7
    %p201 = scmp.ne.s32.totalorder %s196, %s198
    %p202 = scmp.eq.s32.totalorder %s13, 0
    %p203 = por %p201, %p202
    %p204 = scmp.ne.s32.totalorder %s196, %s198
    %p205 = scmp.eq.s32.totalorder %s18, 7
    %p206 = por %p204, %p205
    %p207 = scmp.ne.s32.totalorder %s198, %s199
    %p208 = scmp.eq.s32.totalorder %s18, 0
    %p209 = por %p207, %p208
    %p210 = scmp.ne.s32.totalorder %s198, %s199
    %p211 = scmp.eq.s32.totalorder %s19, 7
    %p212 = por %p210, %p211
    %p214 = scmp.ne.s32.totalorder %s199, %s213
    %p215 = scmp.eq.s32.totalorder %s19, 0
    %p216 = por %p214, %p215
    %s217 = ssub.s32 %s20, %s32
    %s218 = ssub.s32 %s21, %s28
    %s219 = sor.u32 %s217, %s218
    %p220 = scmp.eq.s32.totalorder %s219, 0
    %s222 = sadd.s32 %s221, 1
    %s223 = scalar_select %p220, %s221, %s222
    %p226 = pneg %p220
    %p227 = scmp.eq.s32.totalorder %s13, 7
    %p228 = por %p226, %p227
    %p229 = scmp.ne.s32.totalorder %s221, %s224
    %p230 = scmp.eq.s32.totalorder %s13, 0
    %p231 = por %p229, %p230
    %p232 = scmp.ne.s32.totalorder %s221, %s224
    %p233 = scmp.eq.s32.totalorder %s18, 7
    %p234 = por %p232, %p233
    %p235 = scmp.ne.s32.totalorder %s224, %s225
    %p236 = scmp.eq.s32.totalorder %s18, 0
    %p237 = por %p235, %p236
    %p238 = scmp.ne.s32.totalorder %s224, %s225
    %p239 = scmp.eq.s32.totalorder %s19, 7
    %p240 = por %p238, %p239
    %p242 = scmp.ne.s32.totalorder %s225, %s241
    %p243 = scmp.eq.s32.totalorder %s19, 0
    %p244 = por %p242, %p243
    %p245 = scmp.le.s32.totalorder 1, %s13
    %p246 = scmp.lt.s32.totalorder %s13, 9
    %p247 = pnand %p245, %p246
    %p248 = pneg %p247
    // Predicated region
    $region9: #{tpu_custom_call.1} parent=5 // pred_check
      _
    $region10: #{tpu_custom_call.1} parent=5 // pred_check_branch
      %250 = sbr.rel (%p247) target = $region12
    $region11: #{tpu_custom_call.1} parent=5 // pred_region
      %s251 = ssub.s32 %s13, 1
      // Predicated region
      $region13: #{tpu_custom_call.1} parent=11 // pred_check
        %p252 = pneg %p146
      $region14: #{tpu_custom_call.1} parent=11 // pred_check_branch
        %254 = sbr.rel (%p252) target = $region16
      $region15: #{tpu_custom_call.1} parent=11 // pred_region
        _
      $region16: #{tpu_custom_call.1} parent=11 // pred_fallthru
        _
      // Predicated region
      $region17: #{tpu_custom_call.1} parent=11 // pred_check
        %p255 = pneg %p167
      $region18: #{tpu_custom_call.1} parent=11 // pred_check_branch
        %257 = sbr.rel (%p255) target = $region20
      $region19: #{tpu_custom_call.1} parent=11 // pred_region
        _
      $region20: #{tpu_custom_call.1} parent=11 // pred_fallthru
        _
      // Predicated region
      $region21: #{tpu_custom_call.1} parent=11 // pred_check
        %p258 = pneg %p188
      $region22: #{tpu_custom_call.1} parent=11 // pred_check_branch
        %260 = sbr.rel (%p258) target = $region24
      $region23: #{tpu_custom_call.1} parent=11 // pred_region
        _
      $region24: #{tpu_custom_call.1} parent=11 // pred_fallthru
        _
      // Predicated region
      $region25: #{tpu_custom_call.1} parent=11 // pred_check
        %p261 = pneg %p209
      $region26: #{tpu_custom_call.1} parent=11 // pred_check_branch
        %263 = sbr.rel (%p261) target = $region28
      $region27: #{tpu_custom_call.1} parent=11 // pred_region
        _
      $region28: #{tpu_custom_call.1} parent=11 // pred_fallthru
        _
    $region12: #{tpu_custom_call.1} parent=5 // pred_fallthru
      _
    %p264 = scmp.lt.s32.totalorder %s13, 8
    // Predicated region
    $region29: #{tpu_custom_call.1} parent=5 // pred_check
      %p265 = pneg %p264
    $region30: #{tpu_custom_call.1} parent=5 // pred_check_branch
      %267 = sbr.rel (%p265) target = $region32
    $region31: #{tpu_custom_call.1} parent=5 // pred_region
      // Predicated region
      $region33: #{tpu_custom_call.1} parent=31 // pred_check
        %p268 = pneg %p47
      $region34: #{tpu_custom_call.1} parent=31 // pred_check_branch
        %270 = sbr.rel (%p268) target = $region36
      $region35: #{tpu_custom_call.1} parent=31 // pred_region
        %s271 = smul.u32 4, %s21
        %p272 = scmp.lt.s32.totalorder %s20, 1
        %s273 = scalar_select %p272, %s20, 1
        %p274 = scmp.lt.s32.totalorder %s271, 15
        %s275 = scalar_select %p274, %s271, 15
        %s276 = smul.addr %s275, 2
        %s277 = smul.addr %s273, 32
        %s278 = sadd.s32 %s276, %s277
        %s279 = smul.addr %s278, 8
        %s280 = scalar_lea.vmem %s0, %s279
        %s281 = smul.u32 4, %s21
      $region36: #{tpu_custom_call.1} parent=31 // pred_fallthru
        _
      // Predicated region
      $region37: #{tpu_custom_call.1} parent=31 // pred_check
        %p282 = pneg %p83
      $region38: #{tpu_custom_call.1} parent=31 // pred_check_branch
        %284 = sbr.rel (%p282) target = $region40
      $region39: #{tpu_custom_call.1} parent=31 // pred_region
        %s285 = smul.u32 %s21, 4
        %s286 = ssub.s32 %s285, 1
        %p287 = scmp.gt.s32.totalorder %s286, 0
        %s288 = scalar_select %p287, %s286, 0
        %p289 = scmp.lt.s32.totalorder %s20, 1
        %s290 = scalar_select %p289, %s20, 1
        %p291 = scmp.lt.s32.totalorder %s288, 15
        %s292 = scalar_select %p291, %s288, 15
        %s293 = smul.addr %s292, 2
        %s294 = smul.addr %s290, 32
        %s295 = sadd.s32 %s293, %s294
        %s296 = smul.addr %s295, 8
        %s297 = scalar_lea.vmem %s1, %s296
        %s298 = smul.u32 %s21, 4
        %s299 = ssub.s32 %s298, 1
        %p300 = scmp.gt.s32.totalorder %s299, 0
        %s301 = scalar_select %p300, %s299, 0
      $region40: #{tpu_custom_call.1} parent=31 // pred_fallthru
        _
      // Predicated region
      $region41: #{tpu_custom_call.1} parent=31 // pred_check
        %p302 = pneg %p119
      $region42: #{tpu_custom_call.1} parent=31 // pred_check_branch
        %304 = sbr.rel (%p302) target = $region44
      $region43: #{tpu_custom_call.1} parent=31 // pred_region
        %s305 = smul.u32 %s21, 4
        %s306 = sadd.s32 %s305, 4
        %p307 = scmp.lt.s32.totalorder %s306, 15
        %s308 = scalar_select %p307, %s306, 15
        %p309 = scmp.lt.s32.totalorder %s20, 1
        %s310 = scalar_select %p309, %s20, 1
        %p311 = scmp.lt.s32.totalorder %s308, 15
        %s312 = scalar_select %p311, %s308, 15
        %s313 = smul.addr %s312, 2
        %s314 = smul.addr %s310, 32
        %s315 = sadd.s32 %s313, %s314
        %s316 = smul.addr %s315, 8
        %s317 = scalar_lea.vmem %s2, %s316
        %s318 = smul.u32 %s21, 4
        %s319 = sadd.s32 %s318, 4
        %p320 = scmp.lt.s32.totalorder %s319, 15
        %s321 = scalar_select %p320, %s319, 15
      $region44: #{tpu_custom_call.1} parent=31 // pred_fallthru
        _
    $region32: #{tpu_custom_call.1} parent=5 // pred_fallthru
      _
    %p322 = scmp.le.s32.totalorder 1, %s13
    %p323 = scmp.lt.s32.totalorder %s13, 9
    %p324 = pnand %p322, %p323
    %p325 = pneg %p324
    // Predicated region
    $region45: #{tpu_custom_call.1} parent=5 // pred_check
      _
    $region46: #{tpu_custom_call.1} parent=5 // pred_check_branch
      %327 = sbr.rel (%p324) target = $region48
    $region47: #{tpu_custom_call.1} parent=5 // pred_region
      %s328 = ssub.s32 %s13, 1
      %s329 = smul.u32 4, %s23
      %p330 = scmp.lt.s32.totalorder %s22, 1
      %s331 = scalar_select %p330, %s22, 1
      %p332 = scmp.lt.s32.totalorder %s329, 15
      %s333 = scalar_select %p332, %s329, 15
      %s334 = smul.addr %s333, 2
      %s335 = smul.addr %s331, 32
      %s336 = sadd.s32 %s334, %s335
      %s337 = smul.addr %s336, 8
      %s338 = scalar_lea.vmem %s0, %s337
      %p339 = pneg %p53
      %p340 = pneg %p50
      %s341 = smul.u32 %s23, 4
      %s342 = ssub.s32 %s341, 1
      %p343 = scmp.gt.s32.totalorder %s342, 0
      %s344 = scalar_select %p343, %s342, 0
      %p345 = scmp.lt.s32.totalorder %s22, 1
      %s346 = scalar_select %p345, %s22, 1
      %p347 = scmp.lt.s32.totalorder %s344, 15
      %s348 = scalar_select %p347, %s344, 15
      %s349 = smul.addr %s348, 2
      %s350 = smul.addr %s346, 32
      %s351 = sadd.s32 %s349, %s350
      %s352 = smul.addr %s351, 8
      %s353 = scalar_lea.vmem %s1, %s352
      %p354 = pneg %p89
      %p355 = pneg %p86
      %s356 = smul.u32 %s23, 4
      %s357 = sadd.s32 %s356, 4
      %p358 = scmp.lt.s32.totalorder %s357, 15
      %s359 = scalar_select %p358, %s357, 15
      %p360 = scmp.lt.s32.totalorder %s22, 1
      %s361 = scalar_select %p360, %s22, 1
      %p362 = scmp.lt.s32.totalorder %s359, 15
      %s363 = scalar_select %p362, %s359, 15
      %s364 = smul.addr %s363, 2
      %s365 = smul.addr %s361, 32
      %s366 = sadd.s32 %s364, %s365
      %s367 = smul.addr %s366, 8
      %s368 = scalar_lea.vmem %s2, %s367
      %p369 = pneg %p125
      %p370 = pneg %p122
      %p371 = pneg %p146
      %p372 = pneg %p143
      %p373 = pneg %p167
      %p374 = pneg %p164
      %p375 = pneg %p188
      %p376 = pneg %p185
      %p377 = pneg %p209
      %p378 = pneg %p206
      %p379 = pneg %p237
      %p380 = pneg %p234
      %s381 = smul.u32 4, %s23
      %p382 = scmp.lt.s32.totalorder %s22, 1
      %s383 = scalar_select %p382, %s22, 1
      %p384 = scmp.lt.s32.totalorder %s381, 15
      %s385 = scalar_select %p384, %s381, 15
      %s386 = smul.addr %s385, 2
      %s387 = smul.addr %s383, 32
      %s388 = sadd.s32 %s386, %s387
      %s389 = smul.addr %s388, 8
      %s390 = scalar_lea.vmem %s7, %s389
      %s391 = smul.u32 4, %s23
      %p392 = scmp.lt.s32.totalorder %s22, 1
      %s393 = scalar_select %p392, %s22, 1
      %p394 = scmp.lt.s32.totalorder %s391, 15
      %s395 = scalar_select %p394, %s391, 15
      %s396 = smul.addr %s395, 2
      %s397 = smul.addr %s393, 32
      %s398 = sadd.s32 %s396, %s397
      %s399 = smul.addr %s398, 8
      %s400 = scalar_lea.vmem %s0, %s399
      %s401 = smul.u32 4, %s23
      %s402 = smul.u32 %s23, 4
      %s403 = ssub.s32 %s402, 1
      %p404 = scmp.gt.s32.totalorder %s403, 0
      %s405 = scalar_select %p404, %s403, 0
      %p406 = scmp.lt.s32.totalorder %s22, 1
      %s407 = scalar_select %p406, %s22, 1
      %p408 = scmp.lt.s32.totalorder %s405, 15
      %s409 = scalar_select %p408, %s405, 15
      %s410 = smul.addr %s409, 2
      %s411 = smul.addr %s407, 32
      %s412 = sadd.s32 %s410, %s411
      %s413 = smul.addr %s412, 8
      %s414 = scalar_lea.vmem %s1, %s413
      %s415 = smul.u32 %s23, 4
      %s416 = ssub.s32 %s415, 1
      %p417 = scmp.gt.s32.totalorder %s416, 0
      %s418 = scalar_select %p417, %s416, 0
      %s419 = smul.u32 %s23, 4
      %s420 = sadd.s32 %s419, 4
      %p421 = scmp.lt.s32.totalorder %s420, 15
      %s422 = scalar_select %p421, %s420, 15
      %p423 = scmp.lt.s32.totalorder %s22, 1
      %s424 = scalar_select %p423, %s22, 1
      %p425 = scmp.lt.s32.totalorder %s422, 15
      %s426 = scalar_select %p425, %s422, 15
      %s427 = smul.addr %s426, 2
      %s428 = smul.addr %s424, 32
      %s429 = sadd.s32 %s427, %s428
      %s430 = smul.addr %s429, 8
      %s431 = scalar_lea.vmem %s2, %s430
      %s432 = smul.u32 %s23, 4
      %s433 = sadd.s32 %s432, 4
      %p434 = scmp.lt.s32.totalorder %s433, 15
      %s435 = scalar_select %p434, %s433, 15
      %s436 = smul.u32 4, %s23
      %p437 = scmp.lt.s32.totalorder %s22, 1
      %s438 = scalar_select %p437, %s22, 1
      %p439 = scmp.lt.s32.totalorder %s436, 15
      %s440 = scalar_select %p439, %s436, 15
      %s441 = smul.addr %s440, 2
      %s442 = smul.addr %s438, 32
      %s443 = sadd.s32 %s441, %s442
      %s444 = smul.addr %s443, 8
      %s445 = scalar_lea.vmem %s7, %s444
      %s446 = smul.u32 4, %s23
      %v448 = vld [vmem:[%s3] sm:$0x3]
      %v449 = vld [vmem:[%s4] sm:$0x1]
      %v450 = vld [vmem:[%s400] sm:$0xff]
      %v451 = vld [vmem:[%s400 + $0x8] sm:$0xff]
      %v452 = vld [vmem:[%s400 + $0x10] sm:$0xff]
      %v453 = vld [vmem:[%s400 + $0x18] sm:$0xff]
      %v454 = vld [vmem:[%s400 + $0x20] sm:$0xff]
      %v455 = vld [vmem:[%s400 + $0x28] sm:$0xff]
      %v456 = vld [vmem:[%s400 + $0x30] sm:$0xff]
      %v457 = vld [vmem:[%s400 + $0x38] sm:$0xff]
      %v458 = vpack.c.bf16 %v451, %v450
      %v459 = vpack.c.bf16 %v453, %v452
      %v460 = vpack.c.bf16 %v455, %v454
      %v461 = vpack.c.bf16 %v457, %v456
      %v463 = vlaneseq
      %v464 = vshrl.u32 %v463, 7
      %v465 = vsub.s32 0, %v464
      %v466 = vrot.slane %v449, %v465
      %vm468 = vcmask 31744
      %v470 = vsel %vm468, %v458, 0
      %v473 = vsel %vm468, %v459, 0
      %v476 = vsel %vm468, %v460, 0
      %v479 = vsel %vm468, %v461, 0
      %vm481 = vcmask 1041408
      %v483 = vsel %vm481, %v448, 0
      %485 = vmatprep.subr.bf16.mxu0 0
      %486 = vmatpush1.bf16.msra.mxu0 %v483
      %487 = vmatprep.subr.bf16.mxu0 0
      %488 = vmatpush1.bf16.msra.mxu0 0
      %489 = vmatprep.subr.bf16.mxu0 0
      %490 = vmatpush1.bf16.msra.mxu0 0
      %491 = vmatprep.subr.bf16.mxu0 0
      %492 = vmatpush1.bf16.msra.mxu0 0
      %493 = vmatprep.subr.bf16.mxu0 0
      %494 = vmatpush1.bf16.msra.mxu0 0
      %495 = vmatprep.subr.bf16.mxu0 0
      %496 = vmatpush1.bf16.msra.mxu0 0
      %497 = vmatprep.subr.bf16.mxu0 0
      %498 = vmatpush1.bf16.msra.mxu0 0
      %499 = vmatprep.subr.bf16.mxu0 0
      %500 = vmatpush1.bf16.msra.mxu0 0
      %501 = vmatprep.subr.bf16.mxu0 0
      %502 = vmatpush1.bf16.msra.mxu0 0
      %503 = vmatprep.subr.bf16.mxu0 0
      %504 = vmatpush1.bf16.msra.mxu0 0
      %505 = vmatprep.subr.bf16.mxu0 0
      %506 = vmatpush1.bf16.msra.mxu0 0
      %507 = vmatprep.subr.bf16.mxu0 0
      %508 = vmatpush1.bf16.msra.mxu0 0
      %509 = vmatprep.subr.bf16.mxu0 0
      %510 = vmatpush1.bf16.msra.mxu0 0
      %511 = vmatprep.subr.bf16.mxu0 0
      %512 = vmatpush1.bf16.msra.mxu0 0
      %513 = vmatprep.subr.bf16.mxu0 0
      %514 = vmatpush1.bf16.msra.mxu0 0
      %515 = vmatprep.subr.bf16.mxu0 0
      %516 = vmatpush1.bf16.msra.mxu0 0
      %517 = vmatprep.mubr.bf16.mxu0 0
      %518 = vmatmul.mubr.bf16.gmra.mrb[0].mxu0 %v470
      %v519 = vpop.f32.mrb[0].mxu0
      %v520 = vadd.f32 %v466, %v519
      %v521 = vpop.f32.mrb[0].mxu0
      %v522 = vpop.f32.mrb[0].mxu0
      %v523 = vadd.f32 %v466, %v522
      %v524 = vpop.f32.mrb[0].mxu0
      %525 = vmatprep.mubr.bf16.mxu0 0
      %526 = vmatmul.mubr.bf16.gmra.mrb[0].mxu0 %v473
      %v527 = vpop.f32.mrb[0].mxu0
      %v528 = vadd.f32 %v466, %v527
      %v529 = vpop.f32.mrb[0].mxu0
      %v530 = vpop.f32.mrb[0].mxu0
      %v531 = vadd.f32 %v466, %v530
      %v532 = vpop.f32.mrb[0].mxu0
      %533 = vmatprep.mubr.bf16.mxu0 0
      %534 = vmatmul.mubr.bf16.gmra.mrb[0].mxu0 %v476
      %v535 = vpop.f32.mrb[0].mxu0
      %v536 = vadd.f32 %v466, %v535
      %v537 = vpop.f32.mrb[0].mxu0
      %v538 = vpop.f32.mrb[0].mxu0
      %v539 = vadd.f32 %v466, %v538
      %v540 = vpop.f32.mrb[0].mxu0
      %541 = vmatprep.mubr.bf16.mxu0 0
      %542 = vmatmul.mubr.bf16.gmra.mrb[0].mxu0 %v479
      %v543 = vpop.f32.mrb[0].mxu0
      %v544 = vadd.f32 %v466, %v543
      %v545 = vpop.f32.mrb[0].mxu0
      %v546 = vpop.f32.mrb[0].mxu0
      %v547 = vadd.f32 %v466, %v546
      %v548 = vpop.f32.mrb[0].mxu0
      %549 = vdwg.mxu0
      %v550 = vmul.f32 %v520, 0.1
      %v551 = vmul.f32 %v523, 0.1
      %v552 = vmul.f32 %v528, 0.1
      %v553 = vmul.f32 %v531, 0.1
      %v554 = vmul.f32 %v536, 0.1
      %v555 = vmul.f32 %v539, 0.1
      %v556 = vmul.f32 %v544, 0.1
      %v557 = vmul.f32 %v547, 0.1
      %v558 = vmax.f32 %v520, %v550
      %v559 = vmax.f32 %v523, %v551
      %v560 = vmax.f32 %v528, %v552
      %v561 = vmax.f32 %v531, %v553
      %v562 = vmax.f32 %v536, %v554
      %v563 = vmax.f32 %v539, %v555
      %v564 = vmax.f32 %v544, %v556
      %v565 = vmax.f32 %v547, %v557
      %v566 = vld [vmem:[%s414] sm:$0xff]
      %v567 = vld [vmem:[%s414 + $0x8] sm:$0xff]
      %v568 = vpack.c.bf16 %v567, %v566
      %v570 = vsel %vm468, %v568, 0
      %572 = vmatprep.subr.bf16.mxu0 0
      %573 = vmatpush1.bf16.msra.mxu0 %v483
      %574 = vmatprep.subr.bf16.mxu0 0
      %575 = vmatpush1.bf16.msra.mxu0 0
      %576 = vmatprep.subr.bf16.mxu0 0
      %577 = vmatpush1.bf16.msra.mxu0 0
      %578 = vmatprep.subr.bf16.mxu0 0
      %579 = vmatpush1.bf16.msra.mxu0 0
      %580 = vmatprep.subr.bf16.mxu0 0
      %581 = vmatpush1.bf16.msra.mxu0 0
      %582 = vmatprep.subr.bf16.mxu0 0
      %583 = vmatpush1.bf16.msra.mxu0 0
      %584 = vmatprep.subr.bf16.mxu0 0
      %585 = vmatpush1.bf16.msra.mxu0 0
      %586 = vmatprep.subr.bf16.mxu0 0
      %587 = vmatpush1.bf16.msra.mxu0 0
      %588 = vmatprep.subr.bf16.mxu0 0
      %589 = vmatpush1.bf16.msra.mxu0 0
      %590 = vmatprep.subr.bf16.mxu0 0
      %591 = vmatpush1.bf16.msra.mxu0 0
      %592 = vmatprep.subr.bf16.mxu0 0
      %593 = vmatpush1.bf16.msra.mxu0 0
      %594 = vmatprep.subr.bf16.mxu0 0
      %595 = vmatpush1.bf16.msra.mxu0 0
      %596 = vmatprep.subr.bf16.mxu0 0
      %597 = vmatpush1.bf16.msra.mxu0 0
      %598 = vmatprep.subr.bf16.mxu0 0
      %599 = vmatpush1.bf16.msra.mxu0 0
      %600 = vmatprep.subr.bf16.mxu0 0
      %601 = vmatpush1.bf16.msra.mxu0 0
      %602 = vmatprep.subr.bf16.mxu0 0
      %603 = vmatpush1.bf16.msra.mxu0 0
      %604 = vmatprep.mubr.bf16.mxu0 0
      %605 = vmatmul.mubr.bf16.gmra.mrb[0].mxu0 %v570
      %v606 = vpop.f32.mrb[0].mxu0
      %v607 = vadd.f32 %v466, %v606
      %v608 = vpop.f32.mrb[0].mxu0
      %v609 = vpop.f32.mrb[0].mxu0
      %v610 = vadd.f32 %v466, %v609
      %v611 = vpop.f32.mrb[0].mxu0
      %612 = vdwg.mxu0
      %v613 = vmul.f32 %v607, 0.1
      %v614 = vmul.f32 %v610, 0.1
      %v615 = vmax.f32 %v607, %v613
      %v616 = vmax.f32 %v610, %v614
      %p617 = scmp.eq.s32.totalorder %s23, 0
      %s618 = scalar_select %p617, 0.0, 1.0
      %v619 = vstv %s618
      %v620 = vmul.f32 %v615, %v619
      %v621 = vmul.f32 %v616, %v619
      %v622 = vld [vmem:[%s431] sm:$0xff]
      %v623 = vld [vmem:[%s431 + $0x8] sm:$0xff]
      %v624 = vpack.c.bf16 %v623, %v622
      %v626 = vsel %vm468, %v624, 0
      %628 = vmatprep.subr.bf16.mxu0 0
      %629 = vmatpush1.bf16.msra.mxu0 %v483
      %630 = vmatprep.subr.bf16.mxu0 0
      %631 = vmatpush1.bf16.msra.mxu0 0
      %632 = vmatprep.subr.bf16.mxu0 0
      %633 = vmatpush1.bf16.msra.mxu0 0
      %634 = vmatprep.subr.bf16.mxu0 0
      %635 = vmatpush1.bf16.msra.mxu0 0
      %636 = vmatprep.subr.bf16.mxu0 0
      %637 = vmatpush1.bf16.msra.mxu0 0
      %638 = vmatprep.subr.bf16.mxu0 0
      %639 = vmatpush1.bf16.msra.mxu0 0
      %640 = vmatprep.subr.bf16.mxu0 0
      %641 = vmatpush1.bf16.msra.mxu0 0
      %642 = vmatprep.subr.bf16.mxu0 0
      %643 = vmatpush1.bf16.msra.mxu0 0
      %644 = vmatprep.subr.bf16.mxu0 0
      %645 = vmatpush1.bf16.msra.mxu0 0
      %646 = vmatprep.subr.bf16.mxu0 0
      %647 = vmatpush1.bf16.msra.mxu0 0
      %648 = vmatprep.subr.bf16.mxu0 0
      %649 = vmatpush1.bf16.msra.mxu0 0
      %650 = vmatprep.subr.bf16.mxu0 0
      %651 = vmatpush1.bf16.msra.mxu0 0
      %652 = vmatprep.subr.bf16.mxu0 0
      %653 = vmatpush1.bf16.msra.mxu0 0
      %654 = vmatprep.subr.bf16.mxu0 0
      %655 = vmatpush1.bf16.msra.mxu0 0
      %656 = vmatprep.subr.bf16.mxu0 0
      %657 = vmatpush1.bf16.msra.mxu0 0
      %658 = vmatprep.subr.bf16.mxu0 0
      %659 = vmatpush1.bf16.msra.mxu0 0
      %660 = vmatprep.mubr.bf16.mxu0 0
      %661 = vmatmul.mubr.bf16.gmra.mrb[0].mxu0 %v626
      %v662 = vpop.f32.mrb[0].mxu0
      %v663 = vadd.f32 %v466, %v662
      %v664 = vpop.f32.mrb[0].mxu0
      %v665 = vpop.f32.mrb[0].mxu0
      %v666 = vadd.f32 %v466, %v665
      %v667 = vpop.f32.mrb[0].mxu0
      %668 = vdwg.mxu0
      %v669 = vmul.f32 %v663, 0.1
      %v670 = vmul.f32 %v666, 0.1
      %v671 = vmax.f32 %v663, %v669
      %v672 = vmax.f32 %v666, %v670
      %p673 = scmp.eq.s32.totalorder %s23, 3
      %s674 = scalar_select %p673, 0.0, 1.0
      %v675 = vstv %s674
      %v676 = vmul.f32 %v671, %v675
      %v677 = vmul.f32 %v672, %v675
      %v678 = vlaneseq
      %v679 = vshrl.u32 %v678, 7
      %v680 = vadd.s32 %v679, 8
      %vm681 = vcmp.eq.s32.totalorder %v679, 0
      %vm682 = vcmp.eq.s32.totalorder %v680, 0
      %v683 = vrot.slane %v620, 7
      %v684 = vrot.slane %v621, 7
      %v685 = vrot.slane %v558, 7
      %v686 = vrot.slane %v559, 7
      %v687 = vrot.slane %v560, 7
      %v688 = vrot.slane %v561, 7
      %v689 = vrot.slane %v562, 7
      %v690 = vrot.slane %v563, 7
      %v691 = vrot.slane %v564, 7
      %v692 = vrot.slane %v565, 7
      %v693 = vrot.slane %v676, 7
      %v694 = vrot.slane %v677, 7
      %vm695 = vcmp.lt.s32.totalorder %v679, 1
      %v696 = vsel %vm695, %v693, %v694
      %v697 = vsel %vm695, %v692, %v693
      %v698 = vsel %vm695, %v691, %v692
      %v699 = vsel %vm695, %v690, %v691
      %v700 = vsel %vm695, %v689, %v690
      %v701 = vsel %vm695, %v688, %v689
      %v702 = vsel %vm695, %v687, %v688
      %v703 = vsel %vm695, %v686, %v687
      %v704 = vsel %vm695, %v685, %v686
      %v705 = vsel %vm695, %v684, %v685
      %v706 = vsel %vm695, %v683, %v684
      %v707 = vsel %vm695, %v694, %v683
      %v708 = vsel %vm681, 1, 0
      %v709 = vsel %vm682, 1, 0
      %vm710 = vcmp.eq.s32.totalorder %v708, 1
      %vm711 = vcmp.eq.s32.totalorder %v709, 1
      %v712 = vsel %vm710, 0.0, %v707
      %v713 = vsel %vm711, 0.0, %v706
      %v714 = vsel %vm710, 0.0, %v705
      %v715 = vsel %vm711, 0.0, %v704
      %v716 = vsel %vm710, 0.0, %v703
      %v717 = vsel %vm711, 0.0, %v702
      %v718 = vsel %vm710, 0.0, %v701
      %v719 = vsel %vm711, 0.0, %v700
      %v720 = vsel %vm710, 0.0, %v699
      %v721 = vsel %vm711, 0.0, %v698
      %v722 = vsel %vm710, 0.0, %v697
      %v723 = vsel %vm711, 0.0, %v696
      %vm724 = vcmp.eq.s32.totalorder %v679, 15
      %vm725 = vcmp.eq.s32.totalorder %v680, 15
      %v726 = vrot.slane %v620, 1
      %v727 = vrot.slane %v621, 1
      %v728 = vrot.slane %v558, 1
      %v729 = vrot.slane %v559, 1
      %v730 = vrot.slane %v560, 1
      %v731 = vrot.slane %v561, 1
      %v732 = vrot.slane %v562, 1
      %v733 = vrot.slane %v563, 1
      %v734 = vrot.slane %v564, 1
      %v735 = vrot.slane %v565, 1
      %v736 = vrot.slane %v676, 1
      %v737 = vrot.slane %v677, 1
      %vm738 = vcmp.lt.s32.totalorder %v679, 7
      %v739 = vsel %vm738, %v736, %v737
      %v740 = vsel %vm738, %v735, %v736
      %v741 = vsel %vm738, %v734, %v735
      %v742 = vsel %vm738, %v733, %v734
      %v743 = vsel %vm738, %v732, %v733
      %v744 = vsel %vm738, %v731, %v732
      %v745 = vsel %vm738, %v730, %v731
      %v746 = vsel %vm738, %v729, %v730
      %v747 = vsel %vm738, %v728, %v729
      %v748 = vsel %vm738, %v727, %v728
      %v749 = vsel %vm738, %v726, %v727
      %v750 = vsel %vm738, %v737, %v726
      %v751 = vsel %vm724, 1, 0
      %v752 = vsel %vm725, 1, 0
      %vm753 = vcmp.eq.s32.totalorder %v751, 1
      %vm754 = vcmp.eq.s32.totalorder %v752, 1
      %v755 = vsel %vm753, 0.0, %v749
      %v756 = vsel %vm754, 0.0, %v748
      %v757 = vsel %vm753, 0.0, %v747
      %v758 = vsel %vm754, 0.0, %v746
      %v759 = vsel %vm753, 0.0, %v745
      %v760 = vsel %vm754, 0.0, %v744
      %v761 = vsel %vm753, 0.0, %v743
      %v762 = vsel %vm754, 0.0, %v742
      %v763 = vsel %vm753, 0.0, %v741
      %v764 = vsel %vm754, 0.0, %v740
      %v765 = vsel %vm753, 0.0, %v739
      %v766 = vsel %vm754, 0.0, %v750
      %779 = vrot.lane.b32.xlu0 %v620, 2
      %v780 = vpop.permute.xlu0 %779
      %781 = vrot.lane.b32.xlu0 %v621, 2
      %v782 = vpop.permute.xlu0 %781
      %783 = vrot.lane.b32.xlu0 %v558, 2
      %v784 = vpop.permute.xlu0 %783
      %785 = vrot.lane.b32.xlu0 %v559, 2
      %v786 = vpop.permute.xlu0 %785
      %787 = vrot.lane.b32.xlu0 %v560, 2
      %v788 = vpop.permute.xlu0 %787
      %789 = vrot.lane.b32.xlu0 %v561, 2
      %v790 = vpop.permute.xlu0 %789
      %791 = vrot.lane.b32.xlu0 %v562, 2
      %v792 = vpop.permute.xlu0 %791
      %793 = vrot.lane.b32.xlu0 %v563, 2
      %v794 = vpop.permute.xlu0 %793
      %795 = vrot.lane.b32.xlu0 %v564, 2
      %v796 = vpop.permute.xlu0 %795
      %797 = vrot.lane.b32.xlu0 %v565, 2
      %v798 = vpop.permute.xlu0 %797
      %799 = vrot.lane.b32.xlu0 %v676, 2
      %v800 = vpop.permute.xlu0 %799
      %801 = vrot.lane.b32.xlu0 %v677, 2
      %v802 = vpop.permute.xlu0 %801
      %827 = vrot.lane.b32.xlu0 %v755, 4
      %v828 = vpop.permute.xlu0 %827
      %829 = vrot.lane.b32.xlu0 %v756, 4
      %v830 = vpop.permute.xlu0 %829
      %831 = vrot.lane.b32.xlu0 %v757, 4
      %v832 = vpop.permute.xlu0 %831
      %833 = vrot.lane.b32.xlu0 %v758, 4
      %v834 = vpop.permute.xlu0 %833
      %835 = vrot.lane.b32.xlu0 %v759, 4
      %v836 = vpop.permute.xlu0 %835
      %837 = vrot.lane.b32.xlu0 %v760, 4
      %v838 = vpop.permute.xlu0 %837
      %839 = vrot.lane.b32.xlu0 %v761, 4
      %v840 = vpop.permute.xlu0 %839
      %841 = vrot.lane.b32.xlu0 %v762, 4
      %v842 = vpop.permute.xlu0 %841
      %843 = vrot.lane.b32.xlu0 %v763, 4
      %v844 = vpop.permute.xlu0 %843
      %845 = vrot.lane.b32.xlu0 %v764, 4
      %v846 = vpop.permute.xlu0 %845
      %847 = vrot.lane.b32.xlu0 %v765, 4
      %v848 = vpop.permute.xlu0 %847
      %849 = vrot.lane.b32.xlu0 %v766, 4
      %v850 = vpop.permute.xlu0 %849
      %vm863 = vcmask 15360
      %v864 = vsel %vm863, %v712, %v780
      %v865 = vsel %vm863, %v713, %v782
      %v866 = vsel %vm863, %v714, %v784
      %v867 = vsel %vm863, %v715, %v786
      %v868 = vsel %vm863, %v716, %v788
      %v869 = vsel %vm863, %v717, %v790
      %v870 = vsel %vm863, %v718, %v792
      %v871 = vsel %vm863, %v719, %v794
      %v872 = vsel %vm863, %v720, %v796
      %v873 = vsel %vm863, %v721, %v798
      %v874 = vsel %vm863, %v722, %v800
      %v875 = vsel %vm863, %v723, %v802
      %v876 = vsel %vm468, %v864, %v828
      %v877 = vsel %vm468, %v865, %v830
      %v878 = vsel %vm468, %v866, %v832
      %v879 = vsel %vm468, %v867, %v834
      %v880 = vsel %vm468, %v868, %v836
      %v881 = vsel %vm468, %v869, %v838
      %v882 = vsel %vm468, %v870, %v840
      %v883 = vsel %vm468, %v871, %v842
      %v884 = vsel %vm468, %v872, %v844
      %v885 = vsel %vm468, %v873, %v846
      %v886 = vsel %vm468, %v874, %v848
      %v887 = vsel %vm468, %v875, %v850
      %896 = vrot.lane.b32.xlu0 %v878, 6
      %v897 = vpop.permute.xlu0 %896
      %898 = vrot.lane.b32.xlu0 %v879, 6
      %v899 = vpop.permute.xlu0 %898
      %900 = vrot.lane.b32.xlu0 %v880, 6
      %v901 = vpop.permute.xlu0 %900
      %902 = vrot.lane.b32.xlu0 %v881, 6
      %v903 = vpop.permute.xlu0 %902
      %904 = vrot.lane.b32.xlu0 %v882, 6
      %v905 = vpop.permute.xlu0 %904
      %906 = vrot.lane.b32.xlu0 %v883, 6
      %v907 = vpop.permute.xlu0 %906
      %908 = vrot.lane.b32.xlu0 %v884, 6
      %v909 = vpop.permute.xlu0 %908
      %910 = vrot.lane.b32.xlu0 %v885, 6
      %v911 = vpop.permute.xlu0 %910
      %922 = vrot.lane.b32.xlu0 %v880, 12
      %v923 = vpop.permute.xlu0 %922
      %924 = vrot.lane.b32.xlu0 %v881, 12
      %v925 = vpop.permute.xlu0 %924
      %926 = vrot.lane.b32.xlu0 %v882, 12
      %v927 = vpop.permute.xlu0 %926
      %928 = vrot.lane.b32.xlu0 %v883, 12
      %v929 = vpop.permute.xlu0 %928
      %930 = vrot.lane.b32.xlu0 %v884, 12
      %v931 = vpop.permute.xlu0 %930
      %932 = vrot.lane.b32.xlu0 %v885, 12
      %v933 = vpop.permute.xlu0 %932
      %934 = vrot.lane.b32.xlu0 %v886, 12
      %v935 = vpop.permute.xlu0 %934
      %936 = vrot.lane.b32.xlu0 %v887, 12
      %v937 = vpop.permute.xlu0 %936
      %vm946 = vcmask 48128
      %v947 = vsel %vm946, %v876, %v897
      %v948 = vsel %vm946, %v877, %v899
      %v949 = vsel %vm946, %v878, %v901
      %v950 = vsel %vm946, %v879, %v903
      %v951 = vsel %vm946, %v880, %v905
      %v952 = vsel %vm946, %v881, %v907
      %v953 = vsel %vm946, %v882, %v909
      %v954 = vsel %vm946, %v883, %v911
      %vm955 = vcmask 97280
      %v956 = vsel %vm955, %v947, %v923
      %v957 = vsel %vm955, %v948, %v925
      %v958 = vsel %vm955, %v949, %v927
      %v959 = vsel %vm955, %v950, %v929
      %v960 = vsel %vm955, %v951, %v931
      %v961 = vsel %vm955, %v952, %v933
      %v962 = vsel %vm955, %v953, %v935
      %v963 = vsel %vm955, %v954, %v937
      %v964 = vpack.c.bf16 %v957, %v956
      %v965 = vpack.c.bf16 %v959, %v958
      %v966 = vpack.c.bf16 %v961, %v960
      %v967 = vpack.c.bf16 %v963, %v962
      %v968 = vld [vmem:[%s5] sm:$0xf]
      %v969 = vld [vmem:[%s5 + $0x4] sm:$0xf]
      %v970 = vld [vmem:[%s5 + $0x8] sm:$0x1]
      %v971 = vld [vmem:[%s6] sm:$0x1]
      %v973 = vlaneseq
      %v974 = vshrl.u32 %v973, 7
      %v975 = vsub.s32 0, %v974
      %v976 = vrot.slane %v971, %v975
      %v981 = vunpack.c.l.b16 %v968
      %v982 = vunpack.c.l.b16 %v969
      %v983 = vunpack.c.l.b16 %v970
      %v984 = vpack.c.b16 %v982, %v981
      %v985 = vpack.c.b16 %v983, %v983
      %vm987 = vcmask 146432
      %v989 = vsel %vm987, %v964, 0
      %v992 = vsel %vm987, %v965, 0
      %v995 = vsel %vm987, %v966, 0
      %v998 = vsel %vm987, %v967, 0
      %vm1000 = vcmask 1040384
      %v1002 = vsel %vm1000, %v985, 0
      %1004 = vmatprep.subr.bf16.mxu0 0
      %1005 = vmatpush1.bf16.msra.mxu0 %v984
      %1006 = vmatprep.subr.bf16.mxu0 0
      %1007 = vmatpush1.bf16.msra.mxu0 %v1002
      %1008 = vmatprep.subr.bf16.mxu0 0
      %1009 = vmatpush1.bf16.msra.mxu0 0
      %1010 = vmatprep.subr.bf16.mxu0 0
      %1011 = vmatpush1.bf16.msra.mxu0 0
      %1012 = vmatprep.subr.bf16.mxu0 0
      %1013 = vmatpush1.bf16.msra.mxu0 0
      %1014 = vmatprep.subr.bf16.mxu0 0
      %1015 = vmatpush1.bf16.msra.mxu0 0
      %1016 = vmatprep.subr.bf16.mxu0 0
      %1017 = vmatpush1.bf16.msra.mxu0 0
      %1018 = vmatprep.subr.bf16.mxu0 0
      %1019 = vmatpush1.bf16.msra.mxu0 0
      %1020 = vmatprep.subr.bf16.mxu0 0
      %1021 = vmatpush1.bf16.msra.mxu0 0
      %1022 = vmatprep.subr.bf16.mxu0 0
      %1023 = vmatpush1.bf16.msra.mxu0 0
      %1024 = vmatprep.subr.bf16.mxu0 0
      %1025 = vmatpush1.bf16.msra.mxu0 0
      %1026 = vmatprep.subr.bf16.mxu0 0
      %1027 = vmatpush1.bf16.msra.mxu0 0
      %1028 = vmatprep.subr.bf16.mxu0 0
      %1029 = vmatpush1.bf16.msra.mxu0 0
      %1030 = vmatprep.subr.bf16.mxu0 0
      %1031 = vmatpush1.bf16.msra.mxu0 0
      %1032 = vmatprep.subr.bf16.mxu0 0
      %1033 = vmatpush1.bf16.msra.mxu0 0
      %1034 = vmatprep.subr.bf16.mxu0 0
      %1035 = vmatpush1.bf16.msra.mxu0 0
      %1036 = vmatprep.mubr.bf16.mxu0 0
      %1037 = vmatmul.mubr.bf16.gmra.mrb[0].mxu0 %v989
      %v1038 = vpop.f32.mrb[0].mxu0
      %v1039 = vadd.f32 %v976, %v1038
      %v1040 = vpop.f32.mrb[0].mxu0
      %v1041 = vpop.f32.mrb[0].mxu0
      %v1042 = vadd.f32 %v976, %v1041
      %v1043 = vpop.f32.mrb[0].mxu0
      %1044 = vmatprep.mubr.bf16.mxu0 0
      %1045 = vmatmul.mubr.bf16.gmra.mrb[0].mxu0 %v992
      %v1046 = vpop.f32.mrb[0].mxu0
      %v1047 = vadd.f32 %v976, %v1046
      %v1048 = vpop.f32.mrb[0].mxu0
      %v1049 = vpop.f32.mrb[0].mxu0
      %v1050 = vadd.f32 %v976, %v1049
      %v1051 = vpop.f32.mrb[0].mxu0
      %1052 = vmatprep.mubr.bf16.mxu0 0
      %1053 = vmatmul.mubr.bf16.gmra.mrb[0].mxu0 %v995
      %v1054 = vpop.f32.mrb[0].mxu0
      %v1055 = vadd.f32 %v976, %v1054
      %v1056 = vpop.f32.mrb[0].mxu0
      %v1057 = vpop.f32.mrb[0].mxu0
      %v1058 = vadd.f32 %v976, %v1057
      %v1059 = vpop.f32.mrb[0].mxu0
      %1060 = vmatprep.mubr.bf16.mxu0 0
      %1061 = vmatmul.mubr.bf16.gmra.mrb[0].mxu0 %v998
      %v1062 = vpop.f32.mrb[0].mxu0
      %v1063 = vadd.f32 %v976, %v1062
      %v1064 = vpop.f32.mrb[0].mxu0
      %v1065 = vpop.f32.mrb[0].mxu0
      %v1066 = vadd.f32 %v976, %v1065
      %v1067 = vpop.f32.mrb[0].mxu0
      %1068 = vdwg.mxu0
      %v1069 = vmul.f32 %v1039, 0.1
      %v1070 = vmul.f32 %v1042, 0.1
      %v1071 = vmul.f32 %v1047, 0.1
      %v1072 = vmul.f32 %v1050, 0.1
      %v1073 = vmul.f32 %v1055, 0.1
      %v1074 = vmul.f32 %v1058, 0.1
      %v1075 = vmul.f32 %v1063, 0.1
      %v1076 = vmul.f32 %v1066, 0.1
      %v1077 = vmax.f32 %v1039, %v1069
      %v1078 = vmax.f32 %v1042, %v1070
      %v1079 = vmax.f32 %v1047, %v1071
      %v1080 = vmax.f32 %v1050, %v1072
      %v1081 = vmax.f32 %v1055, %v1073
      %v1082 = vmax.f32 %v1058, %v1074
      %v1083 = vmax.f32 %v1063, %v1075
      %v1084 = vmax.f32 %v1066, %v1076
      %v1085 = vadd.f32 %v450, %v1077
      %v1086 = vadd.f32 %v451, %v1078
      %v1087 = vadd.f32 %v452, %v1079
      %v1088 = vadd.f32 %v453, %v1080
      %v1089 = vadd.f32 %v454, %v1081
      %v1090 = vadd.f32 %v455, %v1082
      %v1091 = vadd.f32 %v456, %v1083
      %v1092 = vadd.f32 %v457, %v1084
      %1093 = vst.msk [vmem:[%s445] sm:$0xff] %vm468, %v1085
      %1094 = vst.msk [vmem:[%s445 + $0x8] sm:$0xff] %vm468, %v1086
      %1095 = vst.msk [vmem:[%s445 + $0x10] sm:$0xff] %vm468, %v1087
      %1096 = vst.msk [vmem:[%s445 + $0x18] sm:$0xff] %vm468, %v1088
      %1097 = vst.msk [vmem:[%s445 + $0x20] sm:$0xff] %vm468, %v1089
      %1098 = vst.msk [vmem:[%s445 + $0x28] sm:$0xff] %vm468, %v1090
      %1099 = vst.msk [vmem:[%s445 + $0x30] sm:$0xff] %vm468, %v1091
      %1100 = vst.msk [vmem:[%s445 + $0x38] sm:$0xff] %vm468, %v1092
      %s1101 = smul.u32 4, %s23
      %p1102 = scmp.lt.s32.totalorder %s22, 1
      %s1103 = scalar_select %p1102, %s22, 1
      %p1104 = scmp.lt.s32.totalorder %s1101, 15
      %s1105 = scalar_select %p1104, %s1101, 15
      %s1106 = smul.addr %s1105, 2
      %s1107 = smul.addr %s1103, 32
      %s1108 = sadd.s32 %s1106, %s1107
      %s1109 = smul.addr %s1108, 8
      %s1110 = scalar_lea.vmem %s7, %s1109
      // Predicated region
      $region49: #{tpu_custom_call.1} parent=47 // pred_check
        %p1111 = pneg %p234
      $region50: #{tpu_custom_call.1} parent=47 // pred_check_branch
        %1113 = sbr.rel (%p1111) target = $region52
      $region51: #{tpu_custom_call.1} parent=47 // pred_region
        %s1114 = smul.u32 4, %s23
      $region52: #{tpu_custom_call.1} parent=47 // pred_fallthru
        _
    $region48: #{tpu_custom_call.1} parent=5 // pred_fallthru
      _
    %p1115 = scmp.le.s32.totalorder 2, %s13
    // Predicated region
    $region53: #{tpu_custom_call.1} parent=5 // pred_check
      %p1116 = pneg %p1115
    $region54: #{tpu_custom_call.1} parent=5 // pred_check_branch
      %1118 = sbr.rel (%p1116) target = $region56
    $region55: #{tpu_custom_call.1} parent=5 // pred_region
      %s1119 = ssub.s32 %s13, 2
      // Predicated region
      $region57: #{tpu_custom_call.1} parent=55 // pred_check
        %p1120 = pneg %p240
      $region58: #{tpu_custom_call.1} parent=55 // pred_check_branch
        %1122 = sbr.rel (%p1120) target = $region60
      $region59: #{tpu_custom_call.1} parent=55 // pred_region
        %s1123 = smul.u32 4, %s25
        %p1124 = scmp.lt.s32.totalorder %s24, 1
        %s1125 = scalar_select %p1124, %s24, 1
        %p1126 = scmp.lt.s32.totalorder %s1123, 15
        %s1127 = scalar_select %p1126, %s1123, 15
        %s1128 = smul.addr %s1127, 2
        %s1129 = smul.addr %s1125, 32
        %s1130 = sadd.s32 %s1128, %s1129
        %s1131 = smul.addr %s1130, 8
        %s1132 = scalar_lea.vmem %s7, %s1131
      $region60: #{tpu_custom_call.1} parent=55 // pred_fallthru
        _
    $region56: #{tpu_custom_call.1} parent=5 // pred_fallthru
      _
  $region6: #{tpu_custom_call.1} parent=0 // loop_footer
    %s17 = sadd.s32 1, %s13
  $region7: #{tpu_custom_call.1} parent=0 // loop_footer_branch
    %12 = sbr.rel target = $region3
  $region8: #{tpu_custom_call.1} parent=0 // loop_exit
    _

</llo_original>
